<compile_context>
chip_gen: v7x
topology: tpu7x:2x2x1
jax: 0.10.0
libtpu: 0.0.40
codegen_flags: <defaults>
</compile_context>

<pallas_src>
import functools
import math

import jax
import jax.numpy as jnp
from jax.experimental import pallas as pl
from jax.experimental.pallas import tpu as pltpu


# ----------------------------------------------------------------------------
# helpers
# ----------------------------------------------------------------------------
def _rup(x, m):
    return ((x + m - 1) // m) * m


_TM_CAP = None


def _tm_cap():
    """Generation-aware M-tile cap: 512 on 128 MiB VMEM chips, 256 on 64 MiB."""
    global _TM_CAP
    if _TM_CAP is None:
        try:
            vmem = pltpu.get_tpu_info().vmem_capacity_bytes
        except Exception:
            vmem = 64 * 1024 * 1024
        _TM_CAP = 512 if vmem >= 128 * 1024 * 1024 else 256
    return _TM_CAP


def _pick_tm(M):
    cap = _tm_cap()
    if M >= cap:
        return cap
    return max(8, _rup(M, 8))


# ----------------------------------------------------------------------------
# Pallas kernel: M/N/K-tiled bf16 matmul, f32 accumulation directly in o_ref,
# fused per-column scale/bias (+ optional residual) (+ optional ReLU) epilogue.
#   out = relu( (A @ B) * scale + bias [+ residual] )
# ----------------------------------------------------------------------------
def _mm_kernel(a_ref, b_ref, s_ref, c_ref, o_ref, *, apply_relu):
    k = pl.program_id(2)

    @pl.when(k == 0)
    def _():
        o_ref[...] = jnp.zeros_like(o_ref)

    o_ref[...] += jnp.dot(a_ref[...], b_ref[...],
                          preferred_element_type=jnp.float32)

    @pl.when(k == pl.num_programs(2) - 1)
    def _():
        out = o_ref[...] * s_ref[...] + c_ref[...]
        if apply_relu:
            out = jnp.maximum(out, 0.0)
        o_ref[...] = out


def _mm_res_kernel(a_ref, b_ref, s_ref, c_ref, r_ref, o_ref, *, apply_relu):
    k = pl.program_id(2)

    @pl.when(k == 0)
    def _():
        o_ref[...] = jnp.zeros_like(o_ref)

    o_ref[...] += jnp.dot(a_ref[...], b_ref[...],
                          preferred_element_type=jnp.float32)

    @pl.when(k == pl.num_programs(2) - 1)
    def _():
        out = o_ref[...] * s_ref[...] + c_ref[...] + r_ref[...]
        if apply_relu:
            out = jnp.maximum(out, 0.0)
        o_ref[...] = out


def pallas_matmul_fused(a, b_p, s_p, c_p, K, N, tk, tn, relu, residual=None):
    """a: (M, K) activations; b_p: (Kp, Np) bf16 pre-padded weights;
    s_p/c_p: (1, Np) f32 folded BN scale/shift; residual: (M, N) f32 or None.
    Returns (M, N) f32."""
    M = a.shape[0]
    Kp, Np = b_p.shape
    tm = _pick_tm(M)
    Mp = _rup(M, tm)

    # bf16 operands (f32 accumulation inside the kernel).
    a_p = jnp.pad(a.astype(jnp.bfloat16), ((0, Mp - M), (0, Kp - K)))

    args = [a_p, b_p, s_p, c_p]
    in_specs = [
        pl.BlockSpec((tm, tk), lambda i, j, k: (i, k)),
        pl.BlockSpec((tk, tn), lambda i, j, k: (k, j)),
        pl.BlockSpec((1, tn), lambda i, j, k: (0, j)),
        pl.BlockSpec((1, tn), lambda i, j, k: (0, j)),
    ]
    if residual is not None:
        r_p = jnp.pad(residual.astype(jnp.float32),
                      ((0, Mp - M), (0, Np - N)))
        args.append(r_p)
        in_specs.append(pl.BlockSpec((tm, tn), lambda i, j, k: (i, j)))
        kernel = functools.partial(_mm_res_kernel, apply_relu=bool(relu))
    else:
        kernel = functools.partial(_mm_kernel, apply_relu=bool(relu))

    out = pl.pallas_call(
        kernel,
        out_shape=jax.ShapeDtypeStruct((Mp, Np), jnp.float32),
        grid_spec=pltpu.PrefetchScalarGridSpec(
            num_scalar_prefetch=0,
            grid=(Mp // tm, Np // tn, Kp // tk),
            in_specs=in_specs,
            out_specs=pl.BlockSpec((tm, tn), lambda i, j, k: (i, j)),
        ),
        compiler_params=pltpu.CompilerParams(
            dimension_semantics=("parallel", "parallel", "arbitrary"),
            vmem_limit_bytes=32 * 1024 * 1024),
    )(*args)
    return out[:M, :N]


# ----------------------------------------------------------------------------
# Conv + folded BN (+ReLU) (+fused residual) = im2col + Pallas matmul
# ----------------------------------------------------------------------------
def conv2d_bn(x, pk, stride, padding, relu, residual=None):
    """x: NHWC f32; pk: packed conv params; residual: NHWC f32 (same out shape)."""
    N, H, W, Cin = x.shape
    KH, KW, Cin2, Cout, K, tk, tn = pk["meta"]
    assert Cin == Cin2
    xpad = jnp.pad(x, ((0, 0), (padding, padding), (padding, padding), (0, 0)))
    OH = (H + 2 * padding - KH) // stride + 1
    OW = (W + 2 * padding - KW) // stride + 1

    # TODO(synk): move the (kh, kw) patch gather into the kernel (extra reduction
    # grid axis over kernel taps on the padded NHWC activation) to avoid
    # materializing the KH*KW-times-larger im2col tensor in HBM.
    cols = []
    for kh in range(KH):
        for kw in range(KW):
            cols.append(
                xpad[:,
                     kh: kh + (OH - 1) * stride + 1: stride,
                     kw: kw + (OW - 1) * stride + 1: stride,
                     :])
    # reduction-axis ordering (kh, kw, cin) matches the (2,3,1,0) weight transpose
    cols = jnp.concatenate(cols, axis=-1).reshape(N * OH * OW, K)

    res2d = None
    if residual is not None:
        res2d = residual.reshape(N * OH * OW, Cout)

    out = pallas_matmul_fused(cols, pk["wmat"], pk["scale"], pk["shift"],
                              K, Cout, tk, tn, relu, residual=res2d)
    return out.reshape(N, OH, OW, Cout)


def maxpool_3x3_s2_p1(x):
    """PyTorch MaxPool2d(kernel_size=3, stride=2, padding=1). Tiny op: JAX glue."""
    N, H, W, C = x.shape
    xpad = jnp.pad(x, ((0, 0), (1, 1), (1, 1), (0, 0)),
                   constant_values=-jnp.inf)
    OH = (H + 2 - 3) // 2 + 1
    OW = (W + 2 - 3) // 2 + 1
    out = None
    for kh in range(3):
        for kw in range(3):
            sl = xpad[:, kh: kh + (OH - 1) * 2 + 1: 2,
                      kw: kw + (OW - 1) * 2 + 1: 2, :]
            out = sl if out is None else jnp.maximum(out, sl)
    return out


# ----------------------------------------------------------------------------
# Parameter init (deterministic, synthetic) + one-time weight packing
# ----------------------------------------------------------------------------
def _conv_init(key, cout, cin, kh, kw):
    fan_in = cin * kh * kw
    std = math.sqrt(2.0 / fan_in)
    return std * jax.random.normal(key, (cout, cin, kh, kw), jnp.float32)


def _bn_init(key, c, eps=1e-5):
    k1, k2, k3, k4 = jax.random.split(key, 4)
    gamma = 1.0 + 0.1 * jax.random.normal(k1, (c,), jnp.float32)
    beta = 0.1 * jax.random.normal(k2, (c,), jnp.float32)
    running_mean = 0.1 * jax.random.normal(k3, (c,), jnp.float32)
    running_var = 0.9 + 0.1 * jnp.abs(jax.random.normal(k4, (c,), jnp.float32))
    scale = gamma / jnp.sqrt(running_var + eps)
    shift = beta - running_mean * scale
    return scale, shift


def _pack_conv(w, bn_scale, bn_shift):
    """One-time packing: (Cout,Cin,KH,KW) -> padded (Kp, Np) bf16 weight matrix
    plus padded (1, Np) f32 scale/shift.  Padded columns get scale=0/bias=0 so
    the [:M, :N] slice of the kernel output is always clean."""
    Cout, Cin, KH, KW = w.shape
    K = KH * KW * Cin
    Nn = Cout
    tk = 256 if K > 256 else max(128, _rup(K, 128))
    tn = 256 if Nn > 256 else max(128, _rup(Nn, 128))
    Kp = _rup(K, tk)
    Np = _rup(Nn, tn)
    wmat = jnp.transpose(w, (2, 3, 1, 0)).reshape(K, Nn)
    wmat_p = jnp.zeros((Kp, Np), jnp.bfloat16).at[:K, :Nn].set(
        wmat.astype(jnp.bfloat16))
    s_p = jnp.zeros((1, Np), jnp.float32).at[0, :Nn].set(
        bn_scale.astype(jnp.float32))
    c_p = jnp.zeros((1, Np), jnp.float32).at[0, :Nn].set(
        bn_shift.astype(jnp.float32))
    return {"wmat": wmat_p, "scale": s_p, "shift": c_p,
            "meta": (KH, KW, Cin, Cout, K, tk, tn)}


def init_resnet34_params(key, out_dim):
    keys = iter(jax.random.split(key, 256))
    params = {}

    w = _conv_init(next(keys), 64, 3, 7, 7)
    s, b = _bn_init(next(keys), 64)
    params["stem"] = _pack_conv(w, s, b)

    # (in_ch, out_ch, num_blocks, first_stride) for layer1..layer4
    cfg = [(64, 64, 3, 1), (64, 128, 4, 2), (128, 256, 6, 2), (256, 512, 3, 2)]
    layers = []
    for cin, cout, nblocks, stride in cfg:
        blocks = []
        for bi in range(nblocks):
            st = stride if bi == 0 else 1
            bcin = cin if bi == 0 else cout
            w1 = _conv_init(next(keys), cout, bcin, 3, 3)
            s1, c1 = _bn_init(next(keys), cout)
            w2 = _conv_init(next(keys), cout, cout, 3, 3)
            s2, c2 = _bn_init(next(keys), cout)
            blk = {"stride": st,
                   "conv1": _pack_conv(w1, s1, c1),
                   "conv2": _pack_conv(w2, s2, c2)}
            if st != 1 or bcin != cout:
                wd = _conv_init(next(keys), cout, bcin, 1, 1)
                sd, cd = _bn_init(next(keys), cout)
                blk["down"] = _pack_conv(wd, sd, cd)
            blocks.append(blk)
        layers.append(blocks)
    params["layers"] = layers

    kfc1, kfc2 = jax.random.split(next(keys))
    params["fc_w"] = (1.0 / math.sqrt(512.0)) * jax.random.normal(
        kfc1, (out_dim, 512), jnp.float32)          # PyTorch Linear: (out, in)
    params["fc_b"] = 0.01 * jax.random.normal(kfc2, (out_dim,), jnp.float32)
    return params


# ----------------------------------------------------------------------------
# Forward pass
# ----------------------------------------------------------------------------
def _basic_block(x, blk):
    out = conv2d_bn(x, blk["conv1"], stride=blk["stride"], padding=1, relu=True)
    if "down" in blk:
        identity = conv2d_bn(x, blk["down"], stride=blk["stride"], padding=0,
                             relu=False)
    else:
        identity = x
    # residual add + ReLU fused into the second conv's matmul epilogue
    out = conv2d_bn(out, blk["conv2"], stride=1, padding=1, relu=True,
                    residual=identity)
    return out


def resnet34_forward(params, x_nchw):
    # layout: x_nchw is (N, C, H, W) like PyTorch; transposed to NHWC internally.
    x = jnp.transpose(x_nchw.astype(jnp.float32), (0, 2, 3, 1))

    x = conv2d_bn(x, params["stem"], stride=2, padding=3, relu=True)
    x = maxpool_3x3_s2_p1(x)

    for blocks in params["layers"]:
        for blk in blocks:
            x = _basic_block(x, blk)

    # adaptive avg pool to 1x1 (tiny reduction, JAX glue)
    x = jnp.mean(x, axis=(1, 2))  # (N, 512)

    # Final FC: batch x 512 x out_dim is tiny -> plain jnp.dot per perf review
    # (pallas_call launch + per-step overhead would exceed the math).
    y = jnp.dot(x, params["fc_w"].T) + params["fc_b"]
    return y  # (N, out_dim)


# ----------------------------------------------------------------------------
# main
# ----------------------------------------------------------------------------
if __name__ == "__main__":
    key = jax.random.PRNGKey(0)
    pkey, xkey = jax.random.split(key)

    out_dim = 10
    params = init_resnet34_params(pkey, out_dim)

    # small input consistent with the module: NCHW, 3 input channels
    x = jax.random.normal(xkey, (2, 3, 32, 32), jnp.float32)

    y = resnet34_forward(params, x)
    y = jax.block_until_ready(y)
    assert y.shape == (2, out_dim)
    assert bool(jnp.all(jnp.isfinite(y)))
    print("KERNEL_OK")
</pallas_src>

<mosaic_0001>
module attributes {stable_mosaic.version = 11 : i64} {
  func.func @_mm_kernel(%arg0: i32, %arg1: i32, %arg2: i32, %arg3: memref<256x256xbf16, #tpu.memory_space<vmem>>, %arg4: memref<256x128xbf16, #tpu.memory_space<vmem>>, %arg5: memref<1x128xf32, #tpu.memory_space<vmem>>, %arg6: memref<1x128xf32, #tpu.memory_space<vmem>>, %arg7: memref<256x128xf32, #tpu.memory_space<vmem>>) attributes {dimension_semantics = [#tpu.dimension_semantics<parallel>, #tpu.dimension_semantics<parallel>, #tpu.dimension_semantics<arbitrary>], iteration_bounds = array<i64: 2, 1, 1>, scalar_prefetch = 0 : i64, scratch_operands = 0 : i64, tpu.core_type = #tpu.core_type<tc>, window_params = [{transform_indices = @transform_0, window_bounds = array<i64: 256, 256>}, {transform_indices = @transform_1, window_bounds = array<i64: 256, 128>}, {transform_indices = @transform_2, window_bounds = array<i64: 1, 128>}, {transform_indices = @transform_3, window_bounds = array<i64: 1, 128>}, {transform_indices = @transform_4, window_bounds = array<i64: 256, 128>}]} {
    %c0_i32 = arith.constant 0 : i32
    %0 = arith.cmpi eq, %arg2, %c0_i32 : i32
    %1 = arith.extui %0 : i1 to i32
    %c0_i32_0 = arith.constant 0 : i32
    %2 = arith.cmpi ne, %1, %c0_i32_0 : i32
    scf.if %2 {
      %cst_10 = arith.constant 0.000000e+00 : f32
      %12 = vector.broadcast %cst_10 : f32 to vector<256x128xf32>
      %c0_11 = arith.constant 0 : index
      %c0_12 = arith.constant 0 : index
      %13 = vector.load %arg7[%c0_11, %c0_12] : memref<256x128xf32, #tpu.memory_space<vmem>>, vector<256x128xf32>
      tpu.vector_store %arg7[%c0_11, %c0_12], %12 {strides = array<i32>} : memref<256x128xf32, #tpu.memory_space<vmem>>, vector<256x128xf32>,
    } else {
    }
    %c0 = arith.constant 0 : index
    %c0_1 = arith.constant 0 : index
    %3 = vector.load %arg7[%c0, %c0_1] : memref<256x128xf32, #tpu.memory_space<vmem>>, vector<256x128xf32>
    %c0_2 = arith.constant 0 : index
    %c0_3 = arith.constant 0 : index
    %4 = vector.load %arg3[%c0_2, %c0_3] : memref<256x256xbf16, #tpu.memory_space<vmem>>, vector<256x256xbf16>
    %c0_4 = arith.constant 0 : index
    %c0_5 = arith.constant 0 : index
    %5 = vector.load %arg4[%c0_4, %c0_5] : memref<256x128xbf16, #tpu.memory_space<vmem>>, vector<256x128xbf16>
    %cst = arith.constant dense<0.000000e+00> : vector<256x128xf32>
    %6 = tpu.matmul %4, %5, %cst {dimension_numbers = #tpu.dot_dimension_numbers<[1], [0], [0], [1], [0, 0, 1, 1], [], []>} : vector<256x256xbf16>, vector<256x128xbf16>, vector<256x128xf32> -> vector<256x128xf32>
    %7 = arith.addf %3, %6 : vector<256x128xf32>
    %c0_6 = arith.constant 0 : index
    %c0_7 = arith.constant 0 : index
    %8 = vector.load %arg7[%c0_6, %c0_7] : memref<256x128xf32, #tpu.memory_space<vmem>>, vector<256x128xf32>
    tpu.vector_store %arg7[%c0_6, %c0_7], %7 {strides = array<i32>} : memref<256x128xf32, #tpu.memory_space<vmem>>, vector<256x128xf32>,
    %c0_i32_8 = arith.constant 0 : i32
    %9 = arith.cmpi eq, %arg2, %c0_i32_8 : i32
    %10 = arith.extui %9 : i1 to i32
    %c0_i32_9 = arith.constant 0 : i32
    %11 = arith.cmpi ne, %10, %c0_i32_9 : i32
    scf.if %11 {
      %c0_10 = arith.constant 0 : index
      %c0_11 = arith.constant 0 : index
      %12 = vector.load %arg7[%c0_10, %c0_11] : memref<256x128xf32, #tpu.memory_space<vmem>>, vector<256x128xf32>
      %c0_12 = arith.constant 0 : index
      %c0_13 = arith.constant 0 : index
      %13 = vector.load %arg5[%c0_12, %c0_13] : memref<1x128xf32, #tpu.memory_space<vmem>>, vector<1x128xf32>
      %14 = vector.broadcast %13 : vector<1x128xf32> to vector<256x128xf32>
      %15 = arith.mulf %12, %14 : vector<256x128xf32>
      %c0_14 = arith.constant 0 : index
      %c0_15 = arith.constant 0 : index
      %16 = vector.load %arg6[%c0_14, %c0_15] : memref<1x128xf32, #tpu.memory_space<vmem>>, vector<1x128xf32>
      %17 = vector.broadcast %16 : vector<1x128xf32> to vector<256x128xf32>
      %18 = arith.addf %15, %17 : vector<256x128xf32>
      %cst_16 = arith.constant 0.000000e+00 : f32
      %19 = vector.broadcast %cst_16 : f32 to vector<256x128xf32>
      %20 = arith.maximumf %18, %19 : vector<256x128xf32>
      %c0_17 = arith.constant 0 : index
      %c0_18 = arith.constant 0 : index
      %21 = vector.load %arg7[%c0_17, %c0_18] : memref<256x128xf32, #tpu.memory_space<vmem>>, vector<256x128xf32>
      tpu.vector_store %arg7[%c0_17, %c0_18], %20 {strides = array<i32>} : memref<256x128xf32, #tpu.memory_space<vmem>>, vector<256x128xf32>,
    } else {
    }
    return
  }
  func.func @transform_0(%arg0: i32, %arg1: i32, %arg2: i32) -> (i32, i32) {
    %c0_i32 = arith.constant 0 : i32
    return %arg0, %arg2 : i32, i32
  }
  func.func @transform_1(%arg0: i32, %arg1: i32, %arg2: i32) -> (i32, i32) {
    %c0_i32 = arith.constant 0 : i32
    return %arg2, %arg1 : i32, i32
  }
  func.func @transform_2(%arg0: i32, %arg1: i32, %arg2: i32) -> (i32, i32) {
    %c0_i32 = arith.constant 0 : i32
    %c0_i32_0 = arith.constant 0 : i32
    return %c0_i32, %arg1 : i32, i32
  }
  func.func @transform_3(%arg0: i32, %arg1: i32, %arg2: i32) -> (i32, i32) {
    %c0_i32 = arith.constant 0 : i32
    %c0_i32_0 = arith.constant 0 : i32
    return %c0_i32, %arg1 : i32, i32
  }
  func.func @transform_4(%arg0: i32, %arg1: i32, %arg2: i32) -> (i32, i32) {
    %c0_i32 = arith.constant 0 : i32
    return %arg0, %arg1 : i32, i32
  }
}

</mosaic_0001>

<llo_original>
// kernel: tpu_custom_call.1
$region0: #{tpu_custom_call.1}
  #allocation0 [shape = 'u32[]', space=smem, size = 0x4, offset = 0x4, fixed_abs, tag = 'smem constant byte address 0x4 - core index']
  #allocation1 [shape = 'u32[144,128]{1,0:T(1,128)}', space=vmem, size = 0x12000, scoped, tag = 'internal scratch']
  %s0 = inlined_call_operand.hbm [shape: bf16[512,256], index: 0, kind: input, shape index: {}]
  %s1 = inlined_call_operand.hbm [shape: bf16[256,128], index: 1, kind: input, shape index: {}]
  %s2 = inlined_call_operand.vmem [shape: f32[1,128], index: 2, kind: input, shape index: {}]
  %s3 = inlined_call_operand.vmem [shape: f32[1,128], index: 3, kind: input, shape index: {}]
  %s4 = inlined_call_operand.hbm [shape: f32[512,128], index: 4, kind: output, shape index: {}]
  %s5 = sld [smem:[#allocation0]]
  $region65: #{tpu_custom_call.1} parent=0
    _
  %s7 = ssub.s32 1, %s5
  %s8 = scalar_select 0, %s7, %s5
  $region1: #{tpu_custom_call.1} parent=0
    #allocation2 [shape = 'u8[262144]{0}', space=vmem, size = 0x40000, scoped, tag = 'input window, operand 0']
    #allocation3 [shape = 's32[2]{0}', space=sflag, size = 0x8, scoped, tag = 'scoped memory for tpu_custom_call.1']
    #allocation4 [shape = 's32[2]{0}', space=sflag, size = 0x8, scoped, tag = 'scoped memory for tpu_custom_call.1']
    #allocation5 [shape = 'u8[65536]{0}', space=vmem, size = 0x10000, scoped, tag = 'input window, operand 1, single buffered']
    #allocation6 [shape = 's32[1]{0}', space=sflag, size = 0x4, scoped, tag = 'scoped memory for tpu_custom_call.1']
    #allocation7 [shape = 'u8[262144]{0}', space=vmem, size = 0x40000, scoped, tag = 'output window, operand 0']
    %9 = vsyncpa [#allocation3], 0
    %s10 = scalar_lea.sflag [#allocation3], 1
    %11 = vsyncpa %s10, 0
    %12 = vsyncpa [#allocation6], 0
    %13 = vsyncpa [#allocation4], 0
    %s14 = scalar_lea.sflag [#allocation4], 1
    %15 = vsyncpa %s14, 0
    loop: start=0, step=1, limit=4
    $region2: #{tpu_custom_call.1} parent=1 // loop_pre_header
      _
    $region3: #{tpu_custom_call.1} parent=1 // loop_header
      %s17 = sphi 0, %s21
      %p18 = scmp.ge.s32.totalorder %s17, 4
      %s24 = sphi 0, %s43
      %s25 = sphi 0, %s39
      %s26 = sphi 0, %s35
      %s27 = sphi 0, %s24
      %s28 = sphi 0, %s25
      %s29 = sphi 0, %s26
      %s30 = sphi 0, %s27
      %s31 = sphi 0, %s28
      %s32 = sphi 0, %s29
      %s48 = sphi 0, %s50
      %s51 = sphi 0, %s48
      %s52 = sphi 0, %s51
      %s68 = sphi 0, %s52
      %s76 = sphi 0, %s78
      %s79 = sphi 0, %s76
      %s80 = sphi 0, %s79
      %s96 = sphi 0, %s80
      %s102 = sphi 0, %s104
      %s105 = sphi 0, %s102
      %s106 = sphi 0, %s105
      %s122 = sphi 0, %s106
      %s128 = sphi 0, %s130
      %s131 = sphi 0, %s128
      %s132 = sphi 0, %s131
      %s148 = sphi 0, %s132
      %s156 = sphi 0, %s158
      %s159 = sphi 0, %s156
      %s160 = sphi 0, %s159
      %s176 = sphi 0, %s160
    $region4: #{tpu_custom_call.1} parent=1 // loop_header_branch
      %20 = sbr.rel (%p18) target = $region8
    $region5: #{tpu_custom_call.1} parent=1 // loop_body
      %s22 = ssub.s32 %s17, 1
      %s23 = ssub.s32 %s17, 2
      %s33 = sadd.s32 1, %s26
      %p34 = scmp.ge.s32.totalorder %s33, 1
      %s35 = scalar_select %p34, 0, %s33
      %s36 = sadd.s32 1, %s25
      %s37 = scalar_select %p34, %s36, %s25
      %p38 = scmp.ge.s32.totalorder %s37, 1
      %s39 = scalar_select %p38, 0, %s37
      %s40 = sadd.s32 1, %s24
      %s41 = scalar_select %p38, %s40, %s24
      %p42 = scmp.ge.s32.totalorder %s41, 2
      %s43 = scalar_select %p42, 0, %s41
      %s44 = ssub.s32 %s24, %s43
      %s45 = ssub.s32 %s26, %s35
      %s46 = sor.u32 %s44, %s45
      %p47 = scmp.eq.s32.totalorder %s46, 0
      %s49 = sadd.s32 %s48, 1
      %s50 = scalar_select %p47, %s48, %s49
      %p53 = pneg %p47
      %p54 = scmp.eq.s32.totalorder %s17, 1
      %p55 = por %p53, %p54
      %p56 = scmp.ne.s32.totalorder %s48, %s51
      %p57 = scmp.eq.s32.totalorder %s17, 0
      %p58 = por %p56, %p57
      %p59 = scmp.ne.s32.totalorder %s48, %s51
      %p60 = scmp.eq.s32.totalorder %s22, 1
      %p61 = por %p59, %p60
      %p62 = scmp.ne.s32.totalorder %s51, %s52
      %p63 = scmp.eq.s32.totalorder %s22, 0
      %p64 = por %p62, %p63
      %p65 = scmp.ne.s32.totalorder %s51, %s52
      %p66 = scmp.eq.s32.totalorder %s23, 1
      %p67 = por %p65, %p66
      %p69 = scmp.ne.s32.totalorder %s52, %s68
      %p70 = scmp.eq.s32.totalorder %s23, 0
      %p71 = por %p69, %p70
      %s72 = ssub.s32 %s26, %s35
      %s73 = ssub.s32 %s25, %s39
      %s74 = sor.u32 %s72, %s73
      %p75 = scmp.eq.s32.totalorder %s74, 0
      %s77 = sadd.s32 %s76, 1
      %s78 = scalar_select %p75, %s76, %s77
      %p81 = pneg %p75
      %p82 = scmp.eq.s32.totalorder %s17, 1
      %p83 = por %p81, %p82
      %p84 = scmp.ne.s32.totalorder %s76, %s79
      %p85 = scmp.eq.s32.totalorder %s17, 0
      %p86 = por %p84, %p85
      %p87 = scmp.ne.s32.totalorder %s76, %s79
      %p88 = scmp.eq.s32.totalorder %s22, 1
      %p89 = por %p87, %p88
      %p90 = scmp.ne.s32.totalorder %s79, %s80
      %p91 = scmp.eq.s32.totalorder %s22, 0
      %p92 = por %p90, %p91
      %p93 = scmp.ne.s32.totalorder %s79, %s80
      %p94 = scmp.eq.s32.totalorder %s23, 1
      %p95 = por %p93, %p94
      %p97 = scmp.ne.s32.totalorder %s80, %s96
      %p98 = scmp.eq.s32.totalorder %s23, 0
      %p99 = por %p97, %p98
      %s100 = ssub.s32 %s25, %s39
      %p101 = scmp.eq.s32.totalorder %s100, 0
      %s103 = sadd.s32 %s102, 1
      %s104 = scalar_select %p101, %s102, %s103
      %p107 = pneg %p101
      %p108 = scmp.eq.s32.totalorder %s17, 1
      %p109 = por %p107, %p108
      %p110 = scmp.ne.s32.totalorder %s102, %s105
      %p111 = scmp.eq.s32.totalorder %s17, 0
      %p112 = por %p110, %p111
      %p113 = scmp.ne.s32.totalorder %s102, %s105
      %p114 = scmp.eq.s32.totalorder %s22, 1
      %p115 = por %p113, %p114
      %p116 = scmp.ne.s32.totalorder %s105, %s106
      %p117 = scmp.eq.s32.totalorder %s22, 0
      %p118 = por %p116, %p117
      %p119 = scmp.ne.s32.totalorder %s105, %s106
      %p120 = scmp.eq.s32.totalorder %s23, 1
      %p121 = por %p119, %p120
      %p123 = scmp.ne.s32.totalorder %s106, %s122
      %p124 = scmp.eq.s32.totalorder %s23, 0
      %p125 = por %p123, %p124
      %s126 = ssub.s32 %s25, %s39
      %p127 = scmp.eq.s32.totalorder %s126, 0
      %s129 = sadd.s32 %s128, 1
      %s130 = scalar_select %p127, %s128, %s129
      %p133 = pneg %p127
      %p134 = scmp.eq.s32.totalorder %s17, 1
      %p135 = por %p133, %p134
      %p136 = scmp.ne.s32.totalorder %s128, %s131
      %p137 = scmp.eq.s32.totalorder %s17, 0
      %p138 = por %p136, %p137
      %p139 = scmp.ne.s32.totalorder %s128, %s131
      %p140 = scmp.eq.s32.totalorder %s22, 1
      %p141 = por %p139, %p140
      %p142 = scmp.ne.s32.totalorder %s131, %s132
      %p143 = scmp.eq.s32.totalorder %s22, 0
      %p144 = por %p142, %p143
      %p145 = scmp.ne.s32.totalorder %s131, %s132
      %p146 = scmp.eq.s32.totalorder %s23, 1
      %p147 = por %p145, %p146
      %p149 = scmp.ne.s32.totalorder %s132, %s148
      %p150 = scmp.eq.s32.totalorder %s23, 0
      %p151 = por %p149, %p150
      %s152 = ssub.s32 %s24, %s43
      %s153 = ssub.s32 %s25, %s39
      %s154 = sor.u32 %s152, %s153
      %p155 = scmp.eq.s32.totalorder %s154, 0
      %s157 = sadd.s32 %s156, 1
      %s158 = scalar_select %p155, %s156, %s157
      %p161 = pneg %p155
      %p162 = scmp.eq.s32.totalorder %s17, 1
      %p163 = por %p161, %p162
      %p164 = scmp.ne.s32.totalorder %s156, %s159
      %p165 = scmp.eq.s32.totalorder %s17, 0
      %p166 = por %p164, %p165
      %p167 = scmp.ne.s32.totalorder %s156, %s159
      %p168 = scmp.eq.s32.totalorder %s22, 1
      %p169 = por %p167, %p168
      %p170 = scmp.ne.s32.totalorder %s159, %s160
      %p171 = scmp.eq.s32.totalorder %s22, 0
      %p172 = por %p170, %p171
      %p173 = scmp.ne.s32.totalorder %s159, %s160
      %p174 = scmp.eq.s32.totalorder %s23, 1
      %p175 = por %p173, %p174
      %p177 = scmp.ne.s32.totalorder %s160, %s176
      %p178 = scmp.eq.s32.totalorder %s23, 0
      %p179 = por %p177, %p178
      %p180 = scmp.le.s32.totalorder 1, %s17
      %p181 = scmp.lt.s32.totalorder %s17, 3
      %p182 = pnand %p180, %p181
      %p183 = pneg %p182
      // Predicated region
      $region9: #{tpu_custom_call.1} parent=5 // pred_check
        _
      $region10: #{tpu_custom_call.1} parent=5 // pred_check_branch
        %185 = sbr.rel (%p182) target = $region12
      $region11: #{tpu_custom_call.1} parent=5 // pred_region
        %s186 = ssub.s32 %s17, 1
        // Predicated region
        $region13: #{tpu_custom_call.1} parent=11 // pred_check
          %p187 = pneg %p92
        $region14: #{tpu_custom_call.1} parent=11 // pred_check_branch
          %189 = sbr.rel (%p187) target = $region16
        $region15: #{tpu_custom_call.1} parent=11 // pred_region
          %s190 = smul.u32 32, %s29
          %s192 = ssub.s32 2048, 2048
          %193 = vsyncadd [#allocation6], %s192
          %s194 = sadd.s32 %s28, %s190
          %s195 = smul.addr %s194, 64
          %s196 = scalar_lea.hbm %s1, %s195
          %s197 = sshll.u32 [#allocation5], 4
          %s198 = int_to_ptr.vmem [resolvable:$true] %s197
          %203 = dma.hbm_to_vmem [thread:$0]  %s196, 2048, %s198, [#allocation6], 64, 64, 4
        $region16: #{tpu_custom_call.1} parent=11 // pred_fallthru
          _
        // Predicated region
        $region17: #{tpu_custom_call.1} parent=11 // pred_check
          %p204 = pneg %p118
        $region18: #{tpu_custom_call.1} parent=11 // pred_check_branch
          %206 = sbr.rel (%p204) target = $region20
        $region19: #{tpu_custom_call.1} parent=11 // pred_region
          %p207 = scmp.lt.s32.totalorder %s28, 0
          %s208 = scalar_select %p207, %s28, 0
          %s209 = scalar_lea.vmem %s2, %s208
        $region20: #{tpu_custom_call.1} parent=11 // pred_fallthru
          _
        // Predicated region
        $region21: #{tpu_custom_call.1} parent=11 // pred_check
          %p210 = pneg %p144
        $region22: #{tpu_custom_call.1} parent=11 // pred_check_branch
          %212 = sbr.rel (%p210) target = $region24
        $region23: #{tpu_custom_call.1} parent=11 // pred_region
          %p213 = scmp.lt.s32.totalorder %s28, 0
          %s214 = scalar_select %p213, %s28, 0
          %s215 = scalar_lea.vmem %s3, %s214
        $region24: #{tpu_custom_call.1} parent=11 // pred_fallthru
          _
      $region12: #{tpu_custom_call.1} parent=5 // pred_fallthru
        _
      %p216 = scmp.lt.s32.totalorder %s17, 2
      // Predicated region
      $region25: #{tpu_custom_call.1} parent=5 // pred_check
        %p217 = pneg %p216
      $region26: #{tpu_custom_call.1} parent=5 // pred_check_branch
        %219 = sbr.rel (%p217) target = $region28
      $region27: #{tpu_custom_call.1} parent=5 // pred_region
        // Predicated region
        $region29: #{tpu_custom_call.1} parent=27 // pred_check
          %p220 = pneg %p58
        $region30: #{tpu_custom_call.1} parent=27 // pred_check_branch
          %222 = sbr.rel (%p220) target = $region32
        $region31: #{tpu_custom_call.1} parent=27 // pred_region
          %s223 = sand.u32 %s48, 1
          %s224 = scalar_lea.sflag [#allocation3], %s223
          %s225 = sand.u32 %s48, 1
          %s226 = smul.addr %s225, 256
          %s227 = scalar_lea.vmem [#allocation2], %s226
          %s228 = smul.u32 32, %s24
          %s229 = smul.u32 2, %s26
          %s231 = ssub.s32 4096, 4096
          %232 = vsyncadd %s224, %s231
          %s233 = smul.addr %s228, 2
          %s234 = sadd.s32 %s229, %s233
          %s235 = smul.addr %s234, 64
          %s236 = scalar_lea.hbm %s0, %s235
          %s237 = sshll.u32 %s227, 4
          %s238 = int_to_ptr.vmem [resolvable:$true] %s237
          %243 = dma.hbm_to_vmem [thread:$0]  %s236, 4096, %s238, %s224, 128, 128, 8
        $region32: #{tpu_custom_call.1} parent=27 // pred_fallthru
          _
      $region28: #{tpu_custom_call.1} parent=5 // pred_fallthru
        _
      %p244 = scmp.le.s32.totalorder 1, %s17
      %p245 = scmp.lt.s32.totalorder %s17, 3
      %p246 = pnand %p244, %p245
      %p247 = pneg %p246
      // Predicated region
      $region33: #{tpu_custom_call.1} parent=5 // pred_check
        _
      $region34: #{tpu_custom_call.1} parent=5 // pred_check_branch
        %249 = sbr.rel (%p246) target = $region36
      $region35: #{tpu_custom_call.1} parent=5 // pred_region
        %s250 = ssub.s32 %s17, 1
        %s251 = sand.u32 %s51, 1
        %s252 = scalar_lea.sflag [#allocation3], %s251
        %s253 = sand.u32 %s51, 1
        %s254 = smul.addr %s253, 256
        %s255 = scalar_lea.vmem [#allocation2], %s254
        // Predicated region
        $region37: #{tpu_custom_call.1} parent=35 // pred_check
          %p256 = pneg %p64
        $region38: #{tpu_custom_call.1} parent=35 // pred_check_branch
          %258 = sbr.rel (%p256) target = $region40
        $region39: #{tpu_custom_call.1} parent=35 // pred_region
          %259 = dma.done %s252, 4096
        $region40: #{tpu_custom_call.1} parent=35 // pred_fallthru
          _
        // Predicated region
        $region41: #{tpu_custom_call.1} parent=35 // pred_check
          %p260 = pneg %p92
        $region42: #{tpu_custom_call.1} parent=35 // pred_check_branch
          %262 = sbr.rel (%p260) target = $region44
        $region43: #{tpu_custom_call.1} parent=35 // pred_region
          %263 = dma.done [#allocation6], 2048
        $region44: #{tpu_custom_call.1} parent=35 // pred_fallthru
          _
        %s264 = sand.u32 %s51, 1
        %s265 = scalar_lea.sflag [#allocation3], %s264
        %s266 = sand.u32 %s51, 1
        %s267 = smul.addr %s266, 256
        %s268 = scalar_lea.vmem [#allocation2], %s267
        %p269 = pneg %p64
        %p270 = pneg %p61
        %p271 = pneg %p92
        %p272 = pneg %p89
        %p273 = scmp.lt.s32.totalorder %s28, 0
        %s274 = scalar_select %p273, %s28, 0
        %s275 = scalar_lea.vmem %s2, %s274
        %p276 = pneg %p118
        %p277 = pneg %p115
        %p278 = scmp.lt.s32.totalorder %s28, 0
        %s279 = scalar_select %p278, %s28, 0
        %s280 = scalar_lea.vmem %s3, %s279
        %p281 = pneg %p144
        %p282 = pneg %p141
        %p283 = pneg %p172
        %p284 = pneg %p169
        %s285 = sand.u32 %s159, 1
        %s286 = scalar_lea.sflag [#allocation4], %s285
        %s287 = sand.u32 %s159, 1
        %s288 = smul.addr %s287, 256
        %s289 = scalar_lea.vmem [#allocation7], %s288
        %s290 = smul.u32 32, %s27
        %s291 = smul.u32 2, %s29
        %s292 = smul.u32 32, %s29
        %p293 = scmp.lt.s32.totalorder %s28, 0
        %s294 = scalar_select %p293, %s28, 0
        %s295 = scalar_lea.vmem %s2, %s294
        %p296 = scmp.lt.s32.totalorder %s28, 0
        %s297 = scalar_select %p296, %s28, 0
        %s298 = scalar_lea.vmem %s3, %s297
        %s299 = smul.u32 32, %s27
        %p301 = scmp.eq.s32.totalorder %s29, 0
        // Predicated region
        $region45: #{tpu_custom_call.1} parent=35 // pred_check
          %p302 = pneg %p301
        $region46: #{tpu_custom_call.1} parent=35 // pred_check_branch
          %304 = sbr.rel (%p302) target = $region48
        $region47: #{tpu_custom_call.1} parent=35 // pred_region
          %305 = vst [vmem:[%s289] sm:$0xff] 0.0
          %306 = vst [vmem:[%s289 + $0x8] sm:$0xff] 0.0
          %307 = vst [vmem:[%s289 + $0x10] sm:$0xff] 0.0
          %308 = vst [vmem:[%s289 + $0x18] sm:$0xff] 0.0
          %309 = vst [vmem:[%s289 + $0x20] sm:$0xff] 0.0
          %310 = vst [vmem:[%s289 + $0x28] sm:$0xff] 0.0
          %311 = vst [vmem:[%s289 + $0x30] sm:$0xff] 0.0
          %312 = vst [vmem:[%s289 + $0x38] sm:$0xff] 0.0
          %313 = vst [vmem:[%s289 + $0x40] sm:$0xff] 0.0
          %314 = vst [vmem:[%s289 + $0x48] sm:$0xff] 0.0
          %315 = vst [vmem:[%s289 + $0x50] sm:$0xff] 0.0
          %316 = vst [vmem:[%s289 + $0x58] sm:$0xff] 0.0
          %317 = vst [vmem:[%s289 + $0x60] sm:$0xff] 0.0
          %318 = vst [vmem:[%s289 + $0x68] sm:$0xff] 0.0
          %319 = vst [vmem:[%s289 + $0x70] sm:$0xff] 0.0
          %320 = vst [vmem:[%s289 + $0x78] sm:$0xff] 0.0
          %321 = vst [vmem:[%s289 + $0x80] sm:$0xff] 0.0
          %322 = vst [vmem:[%s289 + $0x88] sm:$0xff] 0.0
          %323 = vst [vmem:[%s289 + $0x90] sm:$0xff] 0.0
          %324 = vst [vmem:[%s289 + $0x98] sm:$0xff] 0.0
          %325 = vst [vmem:[%s289 + $0xa0] sm:$0xff] 0.0
          %326 = vst [vmem:[%s289 + $0xa8] sm:$0xff] 0.0
          %327 = vst [vmem:[%s289 + $0xb0] sm:$0xff] 0.0
          %328 = vst [vmem:[%s289 + $0xb8] sm:$0xff] 0.0
          %329 = vst [vmem:[%s289 + $0xc0] sm:$0xff] 0.0
          %330 = vst [vmem:[%s289 + $0xc8] sm:$0xff] 0.0
          %331 = vst [vmem:[%s289 + $0xd0] sm:$0xff] 0.0
          %332 = vst [vmem:[%s289 + $0xd8] sm:$0xff] 0.0
          %333 = vst [vmem:[%s289 + $0xe0] sm:$0xff] 0.0
          %334 = vst [vmem:[%s289 + $0xe8] sm:$0xff] 0.0
          %335 = vst [vmem:[%s289 + $0xf0] sm:$0xff] 0.0
          %336 = vst [vmem:[%s289 + $0xf8] sm:$0xff] 0.0
        $region48: #{tpu_custom_call.1} parent=35 // pred_fallthru
          _
        %v337 = vld [vmem:[%s289] sm:$0xff]
        %v338 = vld [vmem:[%s289 + $0x8] sm:$0xff]
        %v339 = vld [vmem:[%s289 + $0x10] sm:$0xff]
        %v340 = vld [vmem:[%s289 + $0x18] sm:$0xff]
        %v341 = vld [vmem:[%s289 + $0x20] sm:$0xff]
        %v342 = vld [vmem:[%s289 + $0x28] sm:$0xff]
        %v343 = vld [vmem:[%s289 + $0x30] sm:$0xff]
        %v344 = vld [vmem:[%s289 + $0x38] sm:$0xff]
        %v345 = vld [vmem:[%s289 + $0x40] sm:$0xff]
        %v346 = vld [vmem:[%s289 + $0x48] sm:$0xff]
        %v347 = vld [vmem:[%s289 + $0x50] sm:$0xff]
        %v348 = vld [vmem:[%s289 + $0x58] sm:$0xff]
        %v349 = vld [vmem:[%s289 + $0x60] sm:$0xff]
        %v350 = vld [vmem:[%s289 + $0x68] sm:$0xff]
        %v351 = vld [vmem:[%s289 + $0x70] sm:$0xff]
        %v352 = vld [vmem:[%s289 + $0x78] sm:$0xff]
        %v353 = vld [vmem:[%s289 + $0x80] sm:$0xff]
        %v354 = vld [vmem:[%s289 + $0x88] sm:$0xff]
        %v355 = vld [vmem:[%s289 + $0x90] sm:$0xff]
        %v356 = vld [vmem:[%s289 + $0x98] sm:$0xff]
        %v357 = vld [vmem:[%s289 + $0xa0] sm:$0xff]
        %v358 = vld [vmem:[%s289 + $0xa8] sm:$0xff]
        %v359 = vld [vmem:[%s289 + $0xb0] sm:$0xff]
        %v360 = vld [vmem:[%s289 + $0xb8] sm:$0xff]
        %v361 = vld [vmem:[%s289 + $0xc0] sm:$0xff]
        %v362 = vld [vmem:[%s289 + $0xc8] sm:$0xff]
        %v363 = vld [vmem:[%s289 + $0xd0] sm:$0xff]
        %v364 = vld [vmem:[%s289 + $0xd8] sm:$0xff]
        %v365 = vld [vmem:[%s289 + $0xe0] sm:$0xff]
        %v366 = vld [vmem:[%s289 + $0xe8] sm:$0xff]
        %v367 = vld [vmem:[%s289 + $0xf0] sm:$0xff]
        %v368 = vld [vmem:[%s289 + $0xf8] sm:$0xff]
        %v369 = vld [vmem:[%s255] sm:$0xff]
        %v370 = vld [vmem:[%s255 + $0x8] sm:$0xff]
        %v371 = vld [vmem:[%s255 + $0x10] sm:$0xff]
        %v372 = vld [vmem:[%s255 + $0x18] sm:$0xff]
        %v373 = vld [vmem:[%s255 + $0x20] sm:$0xff]
        %v374 = vld [vmem:[%s255 + $0x28] sm:$0xff]
        %v375 = vld [vmem:[%s255 + $0x30] sm:$0xff]
        %v376 = vld [vmem:[%s255 + $0x38] sm:$0xff]
        %v377 = vld [vmem:[%s255 + $0x40] sm:$0xff]
        %v378 = vld [vmem:[%s255 + $0x48] sm:$0xff]
        %v379 = vld [vmem:[%s255 + $0x50] sm:$0xff]
        %v380 = vld [vmem:[%s255 + $0x58] sm:$0xff]
        %v381 = vld [vmem:[%s255 + $0x60] sm:$0xff]
        %v382 = vld [vmem:[%s255 + $0x68] sm:$0xff]
        %v383 = vld [vmem:[%s255 + $0x70] sm:$0xff]
        %v384 = vld [vmem:[%s255 + $0x78] sm:$0xff]
        %v385 = vld [vmem:[%s255 + $0x80] sm:$0xff]
        %v386 = vld [vmem:[%s255 + $0x88] sm:$0xff]
        %v387 = vld [vmem:[%s255 + $0x90] sm:$0xff]
        %v388 = vld [vmem:[%s255 + $0x98] sm:$0xff]
        %v389 = vld [vmem:[%s255 + $0xa0] sm:$0xff]
        %v390 = vld [vmem:[%s255 + $0xa8] sm:$0xff]
        %v391 = vld [vmem:[%s255 + $0xb0] sm:$0xff]
        %v392 = vld [vmem:[%s255 + $0xb8] sm:$0xff]
        %v393 = vld [vmem:[%s255 + $0xc0] sm:$0xff]
        %v394 = vld [vmem:[%s255 + $0xc8] sm:$0xff]
        %v395 = vld [vmem:[%s255 + $0xd0] sm:$0xff]
        %v396 = vld [vmem:[%s255 + $0xd8] sm:$0xff]
        %v397 = vld [vmem:[%s255 + $0xe0] sm:$0xff]
        %v398 = vld [vmem:[%s255 + $0xe8] sm:$0xff]
        %v399 = vld [vmem:[%s255 + $0xf0] sm:$0xff]
        %v400 = vld [vmem:[%s255 + $0xf8] sm:$0xff]
        %v401 = vld [vmem:[#allocation5] sm:$0xf]
        %v402 = vld [vmem:[#allocation5 + $0x4] sm:$0xf]
        %v403 = vld [vmem:[#allocation5 + $0x8] sm:$0xf]
        %v404 = vld [vmem:[#allocation5 + $0xc] sm:$0xf]
        %v405 = vld [vmem:[#allocation5 + $0x10] sm:$0xf]
        %v406 = vld [vmem:[#allocation5 + $0x14] sm:$0xf]
        %v407 = vld [vmem:[#allocation5 + $0x18] sm:$0xf]
        %v408 = vld [vmem:[#allocation5 + $0x1c] sm:$0xf]
        %v409 = vld [vmem:[#allocation5 + $0x20] sm:$0xf]
        %v410 = vld [vmem:[#allocation5 + $0x24] sm:$0xf]
        %v411 = vld [vmem:[#allocation5 + $0x28] sm:$0xf]
        %v412 = vld [vmem:[#allocation5 + $0x2c] sm:$0xf]
        %v413 = vld [vmem:[#allocation5 + $0x30] sm:$0xf]
        %v414 = vld [vmem:[#allocation5 + $0x34] sm:$0xf]
        %v415 = vld [vmem:[#allocation5 + $0x38] sm:$0xf]
        %v416 = vld [vmem:[#allocation5 + $0x3c] sm:$0xf]
        %v417 = vld [vmem:[#allocation5 + $0x40] sm:$0xf]
        %v418 = vld [vmem:[#allocation5 + $0x44] sm:$0xf]
        %v419 = vld [vmem:[#allocation5 + $0x48] sm:$0xf]
        %v420 = vld [vmem:[#allocation5 + $0x4c] sm:$0xf]
        %v421 = vld [vmem:[#allocation5 + $0x50] sm:$0xf]
        %v422 = vld [vmem:[#allocation5 + $0x54] sm:$0xf]
        %v423 = vld [vmem:[#allocation5 + $0x58] sm:$0xf]
        %v424 = vld [vmem:[#allocation5 + $0x5c] sm:$0xf]
        %v425 = vld [vmem:[#allocation5 + $0x60] sm:$0xf]
        %v426 = vld [vmem:[#allocation5 + $0x64] sm:$0xf]
        %v427 = vld [vmem:[#allocation5 + $0x68] sm:$0xf]
        %v428 = vld [vmem:[#allocation5 + $0x6c] sm:$0xf]
        %v429 = vld [vmem:[#allocation5 + $0x70] sm:$0xf]
        %v430 = vld [vmem:[#allocation5 + $0x74] sm:$0xf]
        %v431 = vld [vmem:[#allocation5 + $0x78] sm:$0xf]
        %v432 = vld [vmem:[#allocation5 + $0x7c] sm:$0xf]
        %v465 = vunpack.c.l.b16 %v369
        %v466 = vunpack.c.h.b16 %v369
        %v467 = vunpack.c.l.b16 %v370
        %v468 = vunpack.c.h.b16 %v370
        %v469 = vunpack.c.l.b16 %v371
        %v470 = vunpack.c.h.b16 %v371
        %v471 = vunpack.c.l.b16 %v372
        %v472 = vunpack.c.h.b16 %v372
        %v473 = vunpack.c.l.b16 %v373
        %v474 = vunpack.c.h.b16 %v373
        %v475 = vunpack.c.l.b16 %v374
        %v476 = vunpack.c.h.b16 %v374
        %v477 = vunpack.c.l.b16 %v375
        %v478 = vunpack.c.h.b16 %v375
        %v479 = vunpack.c.l.b16 %v376
        %v480 = vunpack.c.h.b16 %v376
        %v481 = vunpack.c.l.b16 %v377
        %v482 = vunpack.c.h.b16 %v377
        %v483 = vunpack.c.l.b16 %v378
        %v484 = vunpack.c.h.b16 %v378
        %v485 = vunpack.c.l.b16 %v379
        %v486 = vunpack.c.h.b16 %v379
        %v487 = vunpack.c.l.b16 %v380
        %v488 = vunpack.c.h.b16 %v380
        %v489 = vunpack.c.l.b16 %v381
        %v490 = vunpack.c.h.b16 %v381
        %v491 = vunpack.c.l.b16 %v382
        %v492 = vunpack.c.h.b16 %v382
        %v493 = vunpack.c.l.b16 %v383
        %v494 = vunpack.c.h.b16 %v383
        %v495 = vunpack.c.l.b16 %v384
        %v496 = vunpack.c.h.b16 %v384
        %v497 = vunpack.c.l.b16 %v385
        %v498 = vunpack.c.h.b16 %v385
        %v499 = vunpack.c.l.b16 %v386
        %v500 = vunpack.c.h.b16 %v386
        %v501 = vunpack.c.l.b16 %v387
        %v502 = vunpack.c.h.b16 %v387
        %v503 = vunpack.c.l.b16 %v388
        %v504 = vunpack.c.h.b16 %v388
        %v505 = vunpack.c.l.b16 %v389
        %v506 = vunpack.c.h.b16 %v389
        %v507 = vunpack.c.l.b16 %v390
        %v508 = vunpack.c.h.b16 %v390
        %v509 = vunpack.c.l.b16 %v391
        %v510 = vunpack.c.h.b16 %v391
        %v511 = vunpack.c.l.b16 %v392
        %v512 = vunpack.c.h.b16 %v392
        %v513 = vunpack.c.l.b16 %v393
        %v514 = vunpack.c.h.b16 %v393
        %v515 = vunpack.c.l.b16 %v394
        %v516 = vunpack.c.h.b16 %v394
        %v517 = vunpack.c.l.b16 %v395
        %v518 = vunpack.c.h.b16 %v395
        %v519 = vunpack.c.l.b16 %v396
        %v520 = vunpack.c.h.b16 %v396
        %v521 = vunpack.c.l.b16 %v397
        %v522 = vunpack.c.h.b16 %v397
        %v523 = vunpack.c.l.b16 %v398
        %v524 = vunpack.c.h.b16 %v398
        %v525 = vunpack.c.l.b16 %v399
        %v526 = vunpack.c.h.b16 %v399
        %v527 = vunpack.c.l.b16 %v400
        %v528 = vunpack.c.h.b16 %v400
        %v529 = vpack.c.b16 %v467, %v465
        %v530 = vpack.c.b16 %v468, %v466
        %v531 = vpack.c.b16 %v471, %v469
        %v532 = vpack.c.b16 %v472, %v470
        %v533 = vpack.c.b16 %v475, %v473
        %v534 = vpack.c.b16 %v476, %v474
        %v535 = vpack.c.b16 %v479, %v477
        %v536 = vpack.c.b16 %v480, %v478
        %v537 = vpack.c.b16 %v483, %v481
        %v538 = vpack.c.b16 %v484, %v482
        %v539 = vpack.c.b16 %v487, %v485
        %v540 = vpack.c.b16 %v488, %v486
        %v541 = vpack.c.b16 %v491, %v489
        %v542 = vpack.c.b16 %v492, %v490
        %v543 = vpack.c.b16 %v495, %v493
        %v544 = vpack.c.b16 %v496, %v494
        %v545 = vpack.c.b16 %v499, %v497
        %v546 = vpack.c.b16 %v500, %v498
        %v547 = vpack.c.b16 %v503, %v501
        %v548 = vpack.c.b16 %v504, %v502
        %v549 = vpack.c.b16 %v507, %v505
        %v550 = vpack.c.b16 %v508, %v506
        %v551 = vpack.c.b16 %v511, %v509
        %v552 = vpack.c.b16 %v512, %v510
        %v553 = vpack.c.b16 %v515, %v513
        %v554 = vpack.c.b16 %v516, %v514
        %v555 = vpack.c.b16 %v519, %v517
        %v556 = vpack.c.b16 %v520, %v518
        %v557 = vpack.c.b16 %v523, %v521
        %v558 = vpack.c.b16 %v524, %v522
        %v559 = vpack.c.b16 %v527, %v525
        %v560 = vpack.c.b16 %v528, %v526
        %v625 = vunpack.c.l.b16 %v401
        %v626 = vunpack.c.l.b16 %v402
        %v627 = vunpack.c.l.b16 %v403
        %v628 = vunpack.c.l.b16 %v404
        %v629 = vunpack.c.l.b16 %v405
        %v630 = vunpack.c.l.b16 %v406
        %v631 = vunpack.c.l.b16 %v407
        %v632 = vunpack.c.l.b16 %v408
        %v633 = vunpack.c.l.b16 %v409
        %v634 = vunpack.c.l.b16 %v410
        %v635 = vunpack.c.l.b16 %v411
        %v636 = vunpack.c.l.b16 %v412
        %v637 = vunpack.c.l.b16 %v413
        %v638 = vunpack.c.l.b16 %v414
        %v639 = vunpack.c.l.b16 %v415
        %v640 = vunpack.c.l.b16 %v416
        %v641 = vunpack.c.l.b16 %v417
        %v642 = vunpack.c.l.b16 %v418
        %v643 = vunpack.c.l.b16 %v419
        %v644 = vunpack.c.l.b16 %v420
        %v645 = vunpack.c.l.b16 %v421
        %v646 = vunpack.c.l.b16 %v422
        %v647 = vunpack.c.l.b16 %v423
        %v648 = vunpack.c.l.b16 %v424
        %v649 = vunpack.c.l.b16 %v425
        %v650 = vunpack.c.l.b16 %v426
        %v651 = vunpack.c.l.b16 %v427
        %v652 = vunpack.c.l.b16 %v428
        %v653 = vunpack.c.l.b16 %v429
        %v654 = vunpack.c.l.b16 %v430
        %v655 = vunpack.c.l.b16 %v431
        %v656 = vunpack.c.l.b16 %v432
        %v657 = vpack.c.b16 %v626, %v625
        %v658 = vpack.c.b16 %v628, %v627
        %v659 = vpack.c.b16 %v630, %v629
        %v660 = vpack.c.b16 %v632, %v631
        %v661 = vpack.c.b16 %v634, %v633
        %v662 = vpack.c.b16 %v636, %v635
        %v663 = vpack.c.b16 %v638, %v637
        %v664 = vpack.c.b16 %v640, %v639
        %v665 = vpack.c.b16 %v642, %v641
        %v666 = vpack.c.b16 %v644, %v643
        %v667 = vpack.c.b16 %v646, %v645
        %v668 = vpack.c.b16 %v648, %v647
        %v669 = vpack.c.b16 %v650, %v649
        %v670 = vpack.c.b16 %v652, %v651
        %v671 = vpack.c.b16 %v654, %v653
        %v672 = vpack.c.b16 %v656, %v655
        %689 = vmatprep.subr.bf16.mxu0 0
        %690 = vmatpush1.bf16.msra.mxu0 %v657
        %691 = vmatprep.subr.bf16.mxu0 0
        %692 = vmatpush1.bf16.msra.mxu0 %v658
        %693 = vmatprep.subr.bf16.mxu0 0
        %694 = vmatpush1.bf16.msra.mxu0 %v659
        %695 = vmatprep.subr.bf16.mxu0 0
        %696 = vmatpush1.bf16.msra.mxu0 %v660
        %697 = vmatprep.subr.bf16.mxu0 0
        %698 = vmatpush1.bf16.msra.mxu0 %v661
        %699 = vmatprep.subr.bf16.mxu0 0
        %700 = vmatpush1.bf16.msra.mxu0 %v662
        %701 = vmatprep.subr.bf16.mxu0 0
        %702 = vmatpush1.bf16.msra.mxu0 %v663
        %703 = vmatprep.subr.bf16.mxu0 0
        %704 = vmatpush1.bf16.msra.mxu0 %v664
        %705 = vmatprep.subr.bf16.mxu0 0
        %706 = vmatpush1.bf16.msra.mxu0 %v665
        %707 = vmatprep.subr.bf16.mxu0 0
        %708 = vmatpush1.bf16.msra.mxu0 %v666
        %709 = vmatprep.subr.bf16.mxu0 0
        %710 = vmatpush1.bf16.msra.mxu0 %v667
        %711 = vmatprep.subr.bf16.mxu0 0
        %712 = vmatpush1.bf16.msra.mxu0 %v668
        %713 = vmatprep.subr.bf16.mxu0 0
        %714 = vmatpush1.bf16.msra.mxu0 %v669
        %715 = vmatprep.subr.bf16.mxu0 0
        %716 = vmatpush1.bf16.msra.mxu0 %v670
        %717 = vmatprep.subr.bf16.mxu0 0
        %718 = vmatpush1.bf16.msra.mxu0 %v671
        %719 = vmatprep.subr.bf16.mxu0 0
        %720 = vmatpush1.bf16.msra.mxu0 %v672
        %721 = vmatprep.mubr.bf16.mxu0 %v530
        %722 = vmatmul.mubr.bf16.gmra.mrb[0].mxu0 %v529
        %v723 = vpop.f32.mrb[0].mxu0
        %v724 = vadd.f32 0.0, %v723
        %v725 = vpop.f32.mrb[0].mxu0
        %v726 = vpop.f32.mrb[0].mxu0
        %v727 = vadd.f32 0.0, %v726
        %v728 = vpop.f32.mrb[0].mxu0
        %729 = vmatprep.mubr.bf16.mxu0 %v532
        %730 = vmatmul.mubr.bf16.gmra.mrb[0].mxu0 %v531
        %v731 = vpop.f32.mrb[0].mxu0
        %v732 = vadd.f32 0.0, %v731
        %v733 = vpop.f32.mrb[0].mxu0
        %v734 = vpop.f32.mrb[0].mxu0
        %v735 = vadd.f32 0.0, %v734
        %v736 = vpop.f32.mrb[0].mxu0
        %737 = vmatprep.mubr.bf16.mxu0 %v534
        %738 = vmatmul.mubr.bf16.gmra.mrb[0].mxu0 %v533
        %v739 = vpop.f32.mrb[0].mxu0
        %v740 = vadd.f32 0.0, %v739
        %v741 = vpop.f32.mrb[0].mxu0
        %v742 = vpop.f32.mrb[0].mxu0
        %v743 = vadd.f32 0.0, %v742
        %v744 = vpop.f32.mrb[0].mxu0
        %745 = vmatprep.mubr.bf16.mxu0 %v536
        %746 = vmatmul.mubr.bf16.gmra.mrb[0].mxu0 %v535
        %v747 = vpop.f32.mrb[0].mxu0
        %v748 = vadd.f32 0.0, %v747
        %v749 = vpop.f32.mrb[0].mxu0
        %v750 = vpop.f32.mrb[0].mxu0
        %v751 = vadd.f32 0.0, %v750
        %v752 = vpop.f32.mrb[0].mxu0
        %753 = vmatprep.mubr.bf16.mxu0 %v538
        %754 = vmatmul.mubr.bf16.gmra.mrb[0].mxu0 %v537
        %v755 = vpop.f32.mrb[0].mxu0
        %v756 = vadd.f32 0.0, %v755
        %v757 = vpop.f32.mrb[0].mxu0
        %v758 = vpop.f32.mrb[0].mxu0
        %v759 = vadd.f32 0.0, %v758
        %v760 = vpop.f32.mrb[0].mxu0
        %761 = vmatprep.mubr.bf16.mxu0 %v540
        %762 = vmatmul.mubr.bf16.gmra.mrb[0].mxu0 %v539
        %v763 = vpop.f32.mrb[0].mxu0
        %v764 = vadd.f32 0.0, %v763
        %v765 = vpop.f32.mrb[0].mxu0
        %v766 = vpop.f32.mrb[0].mxu0
        %v767 = vadd.f32 0.0, %v766
        %v768 = vpop.f32.mrb[0].mxu0
        %769 = vmatprep.mubr.bf16.mxu0 %v542
        %770 = vmatmul.mubr.bf16.gmra.mrb[0].mxu0 %v541
        %v771 = vpop.f32.mrb[0].mxu0
        %v772 = vadd.f32 0.0, %v771
        %v773 = vpop.f32.mrb[0].mxu0
        %v774 = vpop.f32.mrb[0].mxu0
        %v775 = vadd.f32 0.0, %v774
        %v776 = vpop.f32.mrb[0].mxu0
        %777 = vmatprep.mubr.bf16.mxu0 %v544
        %778 = vmatmul.mubr.bf16.gmra.mrb[0].mxu0 %v543
        %v779 = vpop.f32.mrb[0].mxu0
        %v780 = vadd.f32 0.0, %v779
        %v781 = vpop.f32.mrb[0].mxu0
        %v782 = vpop.f32.mrb[0].mxu0
        %v783 = vadd.f32 0.0, %v782
        %v784 = vpop.f32.mrb[0].mxu0
        %785 = vmatprep.mubr.bf16.mxu0 %v546
        %786 = vmatmul.mubr.bf16.gmra.mrb[0].mxu0 %v545
        %v787 = vpop.f32.mrb[0].mxu0
        %v788 = vadd.f32 0.0, %v787
        %v789 = vpop.f32.mrb[0].mxu0
        %v790 = vpop.f32.mrb[0].mxu0
        %v791 = vadd.f32 0.0, %v790
        %v792 = vpop.f32.mrb[0].mxu0
        %793 = vmatprep.mubr.bf16.mxu0 %v548
        %794 = vmatmul.mubr.bf16.gmra.mrb[0].mxu0 %v547
        %v795 = vpop.f32.mrb[0].mxu0
        %v796 = vadd.f32 0.0, %v795
        %v797 = vpop.f32.mrb[0].mxu0
        %v798 = vpop.f32.mrb[0].mxu0
        %v799 = vadd.f32 0.0, %v798
        %v800 = vpop.f32.mrb[0].mxu0
        %801 = vmatprep.mubr.bf16.mxu0 %v550
        %802 = vmatmul.mubr.bf16.gmra.mrb[0].mxu0 %v549
        %v803 = vpop.f32.mrb[0].mxu0
        %v804 = vadd.f32 0.0, %v803
        %v805 = vpop.f32.mrb[0].mxu0
        %v806 = vpop.f32.mrb[0].mxu0
        %v807 = vadd.f32 0.0, %v806
        %v808 = vpop.f32.mrb[0].mxu0
        %809 = vmatprep.mubr.bf16.mxu0 %v552
        %810 = vmatmul.mubr.bf16.gmra.mrb[0].mxu0 %v551
        %v811 = vpop.f32.mrb[0].mxu0
        %v812 = vadd.f32 0.0, %v811
        %v813 = vpop.f32.mrb[0].mxu0
        %v814 = vpop.f32.mrb[0].mxu0
        %v815 = vadd.f32 0.0, %v814
        %v816 = vpop.f32.mrb[0].mxu0
        %817 = vmatprep.mubr.bf16.mxu0 %v554
        %818 = vmatmul.mubr.bf16.gmra.mrb[0].mxu0 %v553
        %v819 = vpop.f32.mrb[0].mxu0
        %v820 = vadd.f32 0.0, %v819
        %v821 = vpop.f32.mrb[0].mxu0
        %v822 = vpop.f32.mrb[0].mxu0
        %v823 = vadd.f32 0.0, %v822
        %v824 = vpop.f32.mrb[0].mxu0
        %825 = vmatprep.mubr.bf16.mxu0 %v556
        %826 = vmatmul.mubr.bf16.gmra.mrb[0].mxu0 %v555
        %v827 = vpop.f32.mrb[0].mxu0
        %v828 = vadd.f32 0.0, %v827
        %v829 = vpop.f32.mrb[0].mxu0
        %v830 = vpop.f32.mrb[0].mxu0
        %v831 = vadd.f32 0.0, %v830
        %v832 = vpop.f32.mrb[0].mxu0
        %833 = vmatprep.mubr.bf16.mxu0 %v558
        %834 = vmatmul.mubr.bf16.gmra.mrb[0].mxu0 %v557
        %v835 = vpop.f32.mrb[0].mxu0
        %v836 = vadd.f32 0.0, %v835
        %v837 = vpop.f32.mrb[0].mxu0
        %v838 = vpop.f32.mrb[0].mxu0
        %v839 = vadd.f32 0.0, %v838
        %v840 = vpop.f32.mrb[0].mxu0
        %841 = vmatprep.mubr.bf16.mxu0 %v560
        %842 = vmatmul.mubr.bf16.gmra.mrb[0].mxu0 %v559
        %v843 = vpop.f32.mrb[0].mxu0
        %v844 = vadd.f32 0.0, %v843
        %v845 = vpop.f32.mrb[0].mxu0
        %v846 = vpop.f32.mrb[0].mxu0
        %v847 = vadd.f32 0.0, %v846
        %v848 = vpop.f32.mrb[0].mxu0
        %849 = vdwg.mxu0
        %v850 = vadd.f32 %v337, %v724
        %v851 = vadd.f32 %v338, %v727
        %v852 = vadd.f32 %v339, %v732
        %v853 = vadd.f32 %v340, %v735
        %v854 = vadd.f32 %v341, %v740
        %v855 = vadd.f32 %v342, %v743
        %v856 = vadd.f32 %v343, %v748
        %v857 = vadd.f32 %v344, %v751
        %v858 = vadd.f32 %v345, %v756
        %v859 = vadd.f32 %v346, %v759
        %v860 = vadd.f32 %v347, %v764
        %v861 = vadd.f32 %v348, %v767
        %v862 = vadd.f32 %v349, %v772
        %v863 = vadd.f32 %v350, %v775
        %v864 = vadd.f32 %v351, %v780
        %v865 = vadd.f32 %v352, %v783
        %v866 = vadd.f32 %v353, %v788
        %v867 = vadd.f32 %v354, %v791
        %v868 = vadd.f32 %v355, %v796
        %v869 = vadd.f32 %v356, %v799
        %v870 = vadd.f32 %v357, %v804
        %v871 = vadd.f32 %v358, %v807
        %v872 = vadd.f32 %v359, %v812
        %v873 = vadd.f32 %v360, %v815
        %v874 = vadd.f32 %v361, %v820
        %v875 = vadd.f32 %v362, %v823
        %v876 = vadd.f32 %v363, %v828
        %v877 = vadd.f32 %v364, %v831
        %v878 = vadd.f32 %v365, %v836
        %v879 = vadd.f32 %v366, %v839
        %v880 = vadd.f32 %v367, %v844
        %v881 = vadd.f32 %v368, %v847
        %882 = vst [vmem:[%s289] sm:$0xff] %v850
        %883 = vst [vmem:[%s289 + $0x8] sm:$0xff] %v851
        %884 = vst [vmem:[%s289 + $0x10] sm:$0xff] %v852
        %885 = vst [vmem:[%s289 + $0x18] sm:$0xff] %v853
        %886 = vst [vmem:[%s289 + $0x20] sm:$0xff] %v854
        %887 = vst [vmem:[%s289 + $0x28] sm:$0xff] %v855
        %888 = vst [vmem:[%s289 + $0x30] sm:$0xff] %v856
        %889 = vst [vmem:[%s289 + $0x38] sm:$0xff] %v857
        %890 = vst [vmem:[%s289 + $0x40] sm:$0xff] %v858
        %891 = vst [vmem:[%s289 + $0x48] sm:$0xff] %v859
        %892 = vst [vmem:[%s289 + $0x50] sm:$0xff] %v860
        %893 = vst [vmem:[%s289 + $0x58] sm:$0xff] %v861
        %894 = vst [vmem:[%s289 + $0x60] sm:$0xff] %v862
        %895 = vst [vmem:[%s289 + $0x68] sm:$0xff] %v863
        %896 = vst [vmem:[%s289 + $0x70] sm:$0xff] %v864
        %897 = vst [vmem:[%s289 + $0x78] sm:$0xff] %v865
        %898 = vst [vmem:[%s289 + $0x80] sm:$0xff] %v866
        %899 = vst [vmem:[%s289 + $0x88] sm:$0xff] %v867
        %900 = vst [vmem:[%s289 + $0x90] sm:$0xff] %v868
        %901 = vst [vmem:[%s289 + $0x98] sm:$0xff] %v869
        %902 = vst [vmem:[%s289 + $0xa0] sm:$0xff] %v870
        %903 = vst [vmem:[%s289 + $0xa8] sm:$0xff] %v871
        %904 = vst [vmem:[%s289 + $0xb0] sm:$0xff] %v872
        %905 = vst [vmem:[%s289 + $0xb8] sm:$0xff] %v873
        %906 = vst [vmem:[%s289 + $0xc0] sm:$0xff] %v874
        %907 = vst [vmem:[%s289 + $0xc8] sm:$0xff] %v875
        %908 = vst [vmem:[%s289 + $0xd0] sm:$0xff] %v876
        %909 = vst [vmem:[%s289 + $0xd8] sm:$0xff] %v877
        %910 = vst [vmem:[%s289 + $0xe0] sm:$0xff] %v878
        %911 = vst [vmem:[%s289 + $0xe8] sm:$0xff] %v879
        %912 = vst [vmem:[%s289 + $0xf0] sm:$0xff] %v880
        %913 = vst [vmem:[%s289 + $0xf8] sm:$0xff] %v881
        // Predicated region
        $region49: #{tpu_custom_call.1} parent=35 // pred_check
          %p914 = pneg %p301
        $region50: #{tpu_custom_call.1} parent=35 // pred_check_branch
          %916 = sbr.rel (%p914) target = $region52
        $region51: #{tpu_custom_call.1} parent=35 // pred_region
          %v917 = vld [vmem:[%s289] sm:$0xff]
          %v918 = vld [vmem:[%s289 + $0x8] sm:$0xff]
          %v919 = vld [vmem:[%s289 + $0x10] sm:$0xff]
          %v920 = vld [vmem:[%s289 + $0x18] sm:$0xff]
          %v921 = vld [vmem:[%s289 + $0x20] sm:$0xff]
          %v922 = vld [vmem:[%s289 + $0x28] sm:$0xff]
          %v923 = vld [vmem:[%s289 + $0x30] sm:$0xff]
          %v924 = vld [vmem:[%s289 + $0x38] sm:$0xff]
          %v925 = vld [vmem:[%s289 + $0x40] sm:$0xff]
          %v926 = vld [vmem:[%s289 + $0x48] sm:$0xff]
          %v927 = vld [vmem:[%s289 + $0x50] sm:$0xff]
          %v928 = vld [vmem:[%s289 + $0x58] sm:$0xff]
          %v929 = vld [vmem:[%s289 + $0x60] sm:$0xff]
          %v930 = vld [vmem:[%s289 + $0x68] sm:$0xff]
          %v931 = vld [vmem:[%s289 + $0x70] sm:$0xff]
          %v932 = vld [vmem:[%s289 + $0x78] sm:$0xff]
          %v933 = vld [vmem:[%s289 + $0x80] sm:$0xff]
          %v934 = vld [vmem:[%s289 + $0x88] sm:$0xff]
          %v935 = vld [vmem:[%s289 + $0x90] sm:$0xff]
          %v936 = vld [vmem:[%s289 + $0x98] sm:$0xff]
          %v937 = vld [vmem:[%s289 + $0xa0] sm:$0xff]
          %v938 = vld [vmem:[%s289 + $0xa8] sm:$0xff]
          %v939 = vld [vmem:[%s289 + $0xb0] sm:$0xff]
          %v940 = vld [vmem:[%s289 + $0xb8] sm:$0xff]
          %v941 = vld [vmem:[%s289 + $0xc0] sm:$0xff]
          %v942 = vld [vmem:[%s289 + $0xc8] sm:$0xff]
          %v943 = vld [vmem:[%s289 + $0xd0] sm:$0xff]
          %v944 = vld [vmem:[%s289 + $0xd8] sm:$0xff]
          %v945 = vld [vmem:[%s289 + $0xe0] sm:$0xff]
          %v946 = vld [vmem:[%s289 + $0xe8] sm:$0xff]
          %v947 = vld [vmem:[%s289 + $0xf0] sm:$0xff]
          %v948 = vld [vmem:[%s289 + $0xf8] sm:$0xff]
          %v949 = vld [vmem:[%s295] sm:$0x1]
          %v951 = vlaneseq
          %v952 = vshrl.u32 %v951, 7
          %v953 = vsub.s32 0, %v952
          %v954 = vrot.slane %v949, %v953
          %v956 = vmul.f32 %v917, %v954
          %v957 = vmul.f32 %v918, %v954
          %v958 = vmul.f32 %v919, %v954
          %v959 = vmul.f32 %v920, %v954
          %v960 = vmul.f32 %v921, %v954
          %v961 = vmul.f32 %v922, %v954
          %v962 = vmul.f32 %v923, %v954
          %v963 = vmul.f32 %v924, %v954
          %v964 = vmul.f32 %v925, %v954
          %v965 = vmul.f32 %v926, %v954
          %v966 = vmul.f32 %v927, %v954
          %v967 = vmul.f32 %v928, %v954
          %v968 = vmul.f32 %v929, %v954
          %v969 = vmul.f32 %v930, %v954
          %v970 = vmul.f32 %v931, %v954
          %v971 = vmul.f32 %v932, %v954
          %v972 = vmul.f32 %v933, %v954
          %v973 = vmul.f32 %v934, %v954
          %v974 = vmul.f32 %v935, %v954
          %v975 = vmul.f32 %v936, %v954
          %v976 = vmul.f32 %v937, %v954
          %v977 = vmul.f32 %v938, %v954
          %v978 = vmul.f32 %v939, %v954
          %v979 = vmul.f32 %v940, %v954
          %v980 = vmul.f32 %v941, %v954
          %v981 = vmul.f32 %v942, %v954
          %v982 = vmul.f32 %v943, %v954
          %v983 = vmul.f32 %v944, %v954
          %v984 = vmul.f32 %v945, %v954
          %v985 = vmul.f32 %v946, %v954
          %v986 = vmul.f32 %v947, %v954
          %v987 = vmul.f32 %v948, %v954
          %v988 = vld [vmem:[%s298] sm:$0x1]
          %v990 = vlaneseq
          %v991 = vshrl.u32 %v990, 7
          %v992 = vsub.s32 0, %v991
          %v993 = vrot.slane %v988, %v992
          %v995 = vadd.f32 %v956, %v993
          %v996 = vadd.f32 %v957, %v993
          %v997 = vadd.f32 %v958, %v993
          %v998 = vadd.f32 %v959, %v993
          %v999 = vadd.f32 %v960, %v993
          %v1000 = vadd.f32 %v961, %v993
          %v1001 = vadd.f32 %v962, %v993
          %v1002 = vadd.f32 %v963, %v993
          %v1003 = vadd.f32 %v964, %v993
          %v1004 = vadd.f32 %v965, %v993
          %v1005 = vadd.f32 %v966, %v993
          %v1006 = vadd.f32 %v967, %v993
          %v1007 = vadd.f32 %v968, %v993
          %v1008 = vadd.f32 %v969, %v993
          %v1009 = vadd.f32 %v970, %v993
          %v1010 = vadd.f32 %v971, %v993
          %v1011 = vadd.f32 %v972, %v993
          %v1012 = vadd.f32 %v973, %v993
          %v1013 = vadd.f32 %v974, %v993
          %v1014 = vadd.f32 %v975, %v993
          %v1015 = vadd.f32 %v976, %v993
          %v1016 = vadd.f32 %v977, %v993
          %v1017 = vadd.f32 %v978, %v993
          %v1018 = vadd.f32 %v979, %v993
          %v1019 = vadd.f32 %v980, %v993
          %v1020 = vadd.f32 %v981, %v993
          %v1021 = vadd.f32 %v982, %v993
          %v1022 = vadd.f32 %v983, %v993
          %v1023 = vadd.f32 %v984, %v993
          %v1024 = vadd.f32 %v985, %v993
          %v1025 = vadd.f32 %v986, %v993
          %v1026 = vadd.f32 %v987, %v993
          %v1027 = vmax.f32 %v995, 0.0
          %v1028 = vmax.f32 %v996, 0.0
          %v1029 = vmax.f32 %v997, 0.0
          %v1030 = vmax.f32 %v998, 0.0
          %v1031 = vmax.f32 %v999, 0.0
          %v1032 = vmax.f32 %v1000, 0.0
          %v1033 = vmax.f32 %v1001, 0.0
          %v1034 = vmax.f32 %v1002, 0.0
          %v1035 = vmax.f32 %v1003, 0.0
          %v1036 = vmax.f32 %v1004, 0.0
          %v1037 = vmax.f32 %v1005, 0.0
          %v1038 = vmax.f32 %v1006, 0.0
          %v1039 = vmax.f32 %v1007, 0.0
          %v1040 = vmax.f32 %v1008, 0.0
          %v1041 = vmax.f32 %v1009, 0.0
          %v1042 = vmax.f32 %v1010, 0.0
          %v1043 = vmax.f32 %v1011, 0.0
          %v1044 = vmax.f32 %v1012, 0.0
          %v1045 = vmax.f32 %v1013, 0.0
          %v1046 = vmax.f32 %v1014, 0.0
          %v1047 = vmax.f32 %v1015, 0.0
          %v1048 = vmax.f32 %v1016, 0.0
          %v1049 = vmax.f32 %v1017, 0.0
          %v1050 = vmax.f32 %v1018, 0.0
          %v1051 = vmax.f32 %v1019, 0.0
          %v1052 = vmax.f32 %v1020, 0.0
          %v1053 = vmax.f32 %v1021, 0.0
          %v1054 = vmax.f32 %v1022, 0.0
          %v1055 = vmax.f32 %v1023, 0.0
          %v1056 = vmax.f32 %v1024, 0.0
          %v1057 = vmax.f32 %v1025, 0.0
          %v1058 = vmax.f32 %v1026, 0.0
          %1059 = vst [vmem:[%s289] sm:$0xff] %v1027
          %1060 = vst [vmem:[%s289 + $0x8] sm:$0xff] %v1028
          %1061 = vst [vmem:[%s289 + $0x10] sm:$0xff] %v1029
          %1062 = vst [vmem:[%s289 + $0x18] sm:$0xff] %v1030
          %1063 = vst [vmem:[%s289 + $0x20] sm:$0xff] %v1031
          %1064 = vst [vmem:[%s289 + $0x28] sm:$0xff] %v1032
          %1065 = vst [vmem:[%s289 + $0x30] sm:$0xff] %v1033
          %1066 = vst [vmem:[%s289 + $0x38] sm:$0xff] %v1034
          %1067 = vst [vmem:[%s289 + $0x40] sm:$0xff] %v1035
          %1068 = vst [vmem:[%s289 + $0x48] sm:$0xff] %v1036
          %1069 = vst [vmem:[%s289 + $0x50] sm:$0xff] %v1037
          %1070 = vst [vmem:[%s289 + $0x58] sm:$0xff] %v1038
          %1071 = vst [vmem:[%s289 + $0x60] sm:$0xff] %v1039
          %1072 = vst [vmem:[%s289 + $0x68] sm:$0xff] %v1040
          %1073 = vst [vmem:[%s289 + $0x70] sm:$0xff] %v1041
          %1074 = vst [vmem:[%s289 + $0x78] sm:$0xff] %v1042
          %1075 = vst [vmem:[%s289 + $0x80] sm:$0xff] %v1043
          %1076 = vst [vmem:[%s289 + $0x88] sm:$0xff] %v1044
          %1077 = vst [vmem:[%s289 + $0x90] sm:$0xff] %v1045
          %1078 = vst [vmem:[%s289 + $0x98] sm:$0xff] %v1046
          %1079 = vst [vmem:[%s289 + $0xa0] sm:$0xff] %v1047
          %1080 = vst [vmem:[%s289 + $0xa8] sm:$0xff] %v1048
          %1081 = vst [vmem:[%s289 + $0xb0] sm:$0xff] %v1049
          %1082 = vst [vmem:[%s289 + $0xb8] sm:$0xff] %v1050
          %1083 = vst [vmem:[%s289 + $0xc0] sm:$0xff] %v1051
          %1084 = vst [vmem:[%s289 + $0xc8] sm:$0xff] %v1052
          %1085 = vst [vmem:[%s289 + $0xd0] sm:$0xff] %v1053
          %1086 = vst [vmem:[%s289 + $0xd8] sm:$0xff] %v1054
          %1087 = vst [vmem:[%s289 + $0xe0] sm:$0xff] %v1055
          %1088 = vst [vmem:[%s289 + $0xe8] sm:$0xff] %v1056
          %1089 = vst [vmem:[%s289 + $0xf0] sm:$0xff] %v1057
          %1090 = vst [vmem:[%s289 + $0xf8] sm:$0xff] %v1058
        $region52: #{tpu_custom_call.1} parent=35 // pred_fallthru
          _
        %s1091 = sand.u32 %s159, 1
        %s1092 = scalar_lea.sflag [#allocation4], %s1091
        %s1093 = sand.u32 %s159, 1
        %s1094 = smul.addr %s1093, 256
        %s1095 = scalar_lea.vmem [#allocation7], %s1094
        // Predicated region
        $region53: #{tpu_custom_call.1} parent=35 // pred_check
          %p1096 = pneg %p169
        $region54: #{tpu_custom_call.1} parent=35 // pred_check_branch
          %1098 = sbr.rel (%p1096) target = $region56
        $region55: #{tpu_custom_call.1} parent=35 // pred_region
          %s1099 = smul.u32 32, %s27
          %s1101 = ssub.s32 4096, 4096
          %1102 = vsyncadd %s1092, %s1101
          %s1103 = sadd.s32 %s28, %s1099
          %s1104 = smul.addr %s1103, 128
          %s1105 = scalar_lea.hbm %s4, %s1104
          %s1106 = sshll.u32 %s1095, 4
          %s1107 = int_to_ptr.vmem [resolvable:$true] %s1106
          %1112 = dma.vmem_to_hbm [thread:$0]  %s1107, 4096, %s1105, %s1092, 128, 128, 8
        $region56: #{tpu_custom_call.1} parent=35 // pred_fallthru
          _
      $region36: #{tpu_custom_call.1} parent=5 // pred_fallthru
        _
      %p1113 = scmp.le.s32.totalorder 2, %s17
      // Predicated region
      $region57: #{tpu_custom_call.1} parent=5 // pred_check
        %p1114 = pneg %p1113
      $region58: #{tpu_custom_call.1} parent=5 // pred_check_branch
        %1116 = sbr.rel (%p1114) target = $region60
      $region59: #{tpu_custom_call.1} parent=5 // pred_region
        %s1117 = ssub.s32 %s17, 2
        // Predicated region
        $region61: #{tpu_custom_call.1} parent=59 // pred_check
          %p1118 = pneg %p175
        $region62: #{tpu_custom_call.1} parent=59 // pred_check_branch
          %1120 = sbr.rel (%p1118) target = $region64
        $region63: #{tpu_custom_call.1} parent=59 // pred_region
          %s1121 = sand.u32 %s160, 1
          %s1122 = scalar_lea.sflag [#allocation4], %s1121
          %s1123 = sand.u32 %s160, 1
          %s1124 = smul.addr %s1123, 256
          %s1125 = scalar_lea.vmem [#allocation7], %s1124
          %1126 = dma.done %s1122, 4096
        $region64: #{tpu_custom_call.1} parent=59 // pred_fallthru
          _
      $region60: #{tpu_custom_call.1} parent=5 // pred_fallthru
        _
    $region6: #{tpu_custom_call.1} parent=1 // loop_footer
      %s21 = sadd.s32 1, %s17
    $region7: #{tpu_custom_call.1} parent=1 // loop_footer_branch
      %16 = sbr.rel target = $region3
    $region8: #{tpu_custom_call.1} parent=1 // loop_exit
      _
    %1127 = vsyncpa [#allocation3], 1
    %s1128 = scalar_lea.sflag [#allocation3], 1
    %1129 = vsyncpa %s1128, 1
    %1130 = vsyncpa [#allocation6], 1
    %1131 = vsyncpa [#allocation4], 1
    %s1132 = scalar_lea.sflag [#allocation4], 1
    %1133 = vsyncpa %s1132, 1

</llo_original>
